<compile_context>
chip_gen: v5e
topology: v5e:2x2
jax: 0.10.0
libtpu: 0.0.40
codegen_flags: <defaults>
</compile_context>

<pallas_src>
import jax
import jax.numpy as jnp
from jax.experimental import pallas as pl
from jax.experimental.pallas import tpu as pltpu


# -----------------------------------------------------------------------------
# Kernel
# -----------------------------------------------------------------------------
def adapter_kernel(x_ref, w1_ref, w2_ref, o_ref):
    # x arrives in its native dtype; cast to the weight/compute dtype *after*
    # the DMA (free VPU work, hidden under MXU/DMA — avoids an extra HBM pass).
    x = x_ref[...].astype(w1_ref.dtype)
    h = jnp.dot(x, w1_ref[...], preferred_element_type=jnp.float32)
    # Fused ReLU (f32) + downcast epilogue: shrinks the live intermediate
    # between the two MXU passes (bf16 halves h's footprint on v6e/v7x).
    h = jnp.maximum(h, 0.0).astype(w2_ref.dtype)
    o = jnp.dot(h, w2_ref[...], preferred_element_type=jnp.float32)
    o_ref[...] = jnp.maximum(o, 0.0).astype(o_ref.dtype)


# -----------------------------------------------------------------------------
# Helpers
# -----------------------------------------------------------------------------
def _round_up(v, m):
    return ((v + m - 1) // m) * m


def _device_kind():
    try:
        return jax.devices()[0].device_kind.lower()
    except Exception:
        return ""


def _is_multi_core_chip():
    # v7x has 2 TensorCores per chip; earlier generations have 1. Splitting a
    # fits-in-one-tile batch only pays when there are >=2 cores to feed.
    return "v7" in _device_kind()


def _vmem_budget_bytes():
    cap = None
    try:
        cap = getattr(pltpu.get_tpu_info(), "vmem_capacity_bytes", None)
    except Exception:
        cap = None
    if not cap:
        cap = 64 << 20            # conservative fallback: v7x physical VMEM
    return int(cap * 3 // 4)      # headroom for Mosaic internal scratch


def _weight_spec(shape, index_map):
    # Resident weight tile (constant block index => fetched once). Prefer
    # single-buffering to halve its VMEM footprint; fall back to the default
    # double-buffer on Pallas versions without pipeline_mode.
    try:
        return pl.BlockSpec(shape, index_map, pipeline_mode=pl.Buffered(1))
    except Exception:
        return pl.BlockSpec(shape, index_map)


def _pick_block_b(B, c_in, c_hid, x_isz, w_isz, o_isz, multi_core, vmem_budget):
    # Sublane packing requirement for the tiled (second-to-last) axis.
    pack = 8 if max(x_isz, o_isz) >= 4 else 16
    # Per-batch-row VMEM cost of one grid step: double-buffered x/out tiles
    # plus f32 intermediates. Weights counted once below (conservatively 2x).
    per_row = (2 * c_in * x_isz        # x tiles (2 pipeline buffers)
               + 2 * c_in * o_isz      # out tiles
               + c_hid * 4             # h (f32 accumulation of matmul 1)
               + c_in * 4)             # f32 accumulator of matmul 2 (pre-cast)
    resident = 2 * 2 * c_in * c_hid * w_isz   # W1 + W2, assume double-buffered
    avail = max(vmem_budget - resident, per_row * pack)
    cap = max(pack, (avail // per_row) // pack * pack)

    target = 1024 if max(x_isz, o_isz) <= 2 else 512
    block_b = min(target, cap)                       # multiple of `pack`
    if multi_core and B > pack:
        # >=2 balanced grid steps so dimension_semantics="parallel" can feed
        # both v7x TensorCores; Pallas masks the partial last block.
        block_b = min(block_b, _round_up(pl.cdiv(B, 2), pack))
    if block_b >= B:
        return B          # single full-batch tile (full dim => layout-legal)
    return block_b        # < B and a multiple of `pack` => layout-legal


# -----------------------------------------------------------------------------
# Wrapper
# -----------------------------------------------------------------------------
def adapter_forward(x, w1, w2, *, block_b=None, compute_dtype=None,
                    out_dtype=None):
    """Adapter forward: relu(relu(x @ w1) @ w2).

    x : (B, c_in)       -- stays in its native dtype in HBM (cast in-kernel).
    w1: (c_in, c_hid)   -- nn.Linear(c_in, c_hid).weight transposed.
    w2: (c_hid, c_in)   -- nn.Linear(c_hid, c_in).weight transposed.
    compute_dtype: optional MXU dtype (e.g. jnp.bfloat16). Only the small,
        fetched-once weights are cast at the boundary.
    out_dtype: output dtype (default x.dtype). Pass jnp.bfloat16 to halve
        output writeback traffic on this bandwidth-bound kernel.
    """
    if out_dtype is None:
        out_dtype = x.dtype
    if compute_dtype is not None:
        w1 = w1.astype(compute_dtype)
        w2 = w2.astype(compute_dtype)

    B, c_in = x.shape
    c_hid = w1.shape[1]
    assert w1.shape == (c_in, c_hid), (w1.shape, (c_in, c_hid))
    assert w2.shape == (c_hid, c_in), (w2.shape, (c_hid, c_in))

    # Lane-dense hidden dim: pad c_hid up to a multiple of 128 (zero columns
    # are harmless through ReLU and contribute nothing through W2's zero rows).
    # TODO(synk): c_in is assumed lane-friendly (multiple of 128 for real CLIP
    # dims); padding it would add an extra HBM pass over x/out, so we don't.
    c_hid_p = _round_up(c_hid, 128)
    if c_hid_p != c_hid:
        w1 = jnp.pad(w1, ((0, 0), (0, c_hid_p - c_hid)))
        w2 = jnp.pad(w2, ((0, c_hid_p - c_hid), (0, 0)))

    x_isz = jnp.dtype(x.dtype).itemsize
    w_isz = jnp.dtype(w1.dtype).itemsize
    o_isz = jnp.dtype(out_dtype).itemsize

    if block_b is None:
        block_b = _pick_block_b(B, c_in, c_hid_p, x_isz, w_isz, o_isz,
                                _is_multi_core_chip(), _vmem_budget_bytes())
    block_b = max(1, min(block_b, B))
    grid = (pl.cdiv(B, block_b),)

    # Explicit VMEM limit from the actual tile footprint (the 16/32 MiB scoped
    # defaults would reject larger tiles on v5e/v6e).
    footprint = (2 * block_b * c_in * x_isz
                 + 2 * block_b * c_in * o_isz
                 + 2 * 2 * c_in * c_hid_p * w_isz
                 + block_b * c_hid_p * 4
                 + block_b * c_in * 4)
    vmem_limit = int(max(32 << 20, footprint + (8 << 20)))

    cost = pl.CostEstimate(
        flops=4 * B * c_in * c_hid_p,                 # two matmuls, 2*M*N*K each
        transcendentals=0,
        bytes_accessed=(B * c_in * x_isz              # x read (native dtype)
                        + 2 * c_in * c_hid_p * w_isz  # W1 + W2
                        + B * c_in * o_isz),          # output writeback
    )

    return pl.pallas_call(
        adapter_kernel,
        out_shape=jax.ShapeDtypeStruct((B, c_in), out_dtype),
        grid_spec=pltpu.PrefetchScalarGridSpec(
            num_scalar_prefetch=0,
            grid=grid,
            in_specs=[
                pl.BlockSpec((block_b, c_in), lambda i: (i, 0)),   # x (pipelined)
                _weight_spec((c_in, c_hid_p), lambda i: (0, 0)),   # W1 (resident)
                _weight_spec((c_hid_p, c_in), lambda i: (0, 0)),   # W2 (resident)
            ],
            out_specs=pl.BlockSpec((block_b, c_in), lambda i: (i, 0)),
        ),
        compiler_params=pltpu.CompilerParams(
            dimension_semantics=("parallel",),
            vmem_limit_bytes=vmem_limit),
        cost_estimate=cost,
    )(x, w1, w2)


def adapter_reference(x, w1, w2):
    h = jnp.maximum(x.astype(jnp.float32) @ w1.astype(jnp.float32), 0.0)
    return jnp.maximum(h @ w2.astype(jnp.float32), 0.0)


# -----------------------------------------------------------------------------
# Self-test
# -----------------------------------------------------------------------------
if __name__ == "__main__":
    key = jax.random.PRNGKey(0)
    kx, k1, k2 = jax.random.split(key, 3)

    # Small shapes consistent with Adapter(c_in, reduction=4).
    B, c_in, reduction = 8, 32, 4
    c_hid = c_in // reduction

    x = jax.random.normal(kx, (B, c_in), dtype=jnp.float32)
    # nn.Linear(c_in, c_hid).weight is (c_hid, c_in); we pass the transpose
    # (in, out) so the kernel computes x @ W1 directly.
    w1 = jax.random.normal(k1, (c_in, c_hid), dtype=jnp.float32) / jnp.sqrt(c_in)
    w2 = jax.random.normal(k2, (c_hid, c_in), dtype=jnp.float32) / jnp.sqrt(c_hid)

    ref = adapter_reference(x, w1, w2)

    # 1) f32 path, exact check vs reference.
    out = jax.block_until_ready(adapter_forward(x, w1, w2))
    assert out.shape == (B, c_in) and out.dtype == x.dtype
    assert jnp.allclose(out, ref, atol=1e-5, rtol=1e-5), "f32 mismatch vs reference"

    # 2) bf16 compute + bf16 output (weights cast at the boundary, x cast
    #    in-kernel). Loose tolerance: h is bf16 between the two matmuls.
    out_bf16 = jax.block_until_ready(
        adapter_forward(x, w1, w2, compute_dtype=jnp.bfloat16,
                        out_dtype=jnp.bfloat16))
    assert out_bf16.shape == (B, c_in) and out_bf16.dtype == jnp.bfloat16
    assert jnp.allclose(out_bf16.astype(jnp.float32), ref, atol=1e-1, rtol=1e-1), \
        "bf16 mismatch vs reference"

    # 3) Tiled-grid path: multiple grid steps with a masked partial tail block.
    Bt, ct = 520, 128
    xt = jax.random.normal(kx, (Bt, ct), dtype=jnp.float32)
    w1t = jax.random.normal(k1, (ct, ct // reduction), dtype=jnp.float32) * 0.05
    w2t = jax.random.normal(k2, (ct // reduction, ct), dtype=jnp.float32) * 0.05
    out_t = jax.block_until_ready(adapter_forward(xt, w1t, w2t, block_b=256))
    ref_t = adapter_reference(xt, w1t, w2t)
    assert jnp.allclose(out_t, ref_t, atol=1e-4, rtol=1e-4), "tiled mismatch"

    print("KERNEL_OK")
</pallas_src>

<mosaic_0001>
module attributes {stable_mosaic.version = 11 : i64} {
  func.func @adapter_kernel(%arg0: i32, %arg1: memref<8x32xf32, #tpu.memory_space<vmem>>, %arg2: memref<32x128xf32, #tpu.memory_space<vmem>>, %arg3: memref<128x32xf32, #tpu.memory_space<vmem>>, %arg4: memref<8x32xf32, #tpu.memory_space<vmem>>) attributes {dimension_semantics = [#tpu.dimension_semantics<parallel>], iteration_bounds = array<i64: 1>, scalar_prefetch = 0 : i64, scratch_operands = 0 : i64, tpu.core_type = #tpu.core_type<tc>, window_params = [{transform_indices = @transform_0, window_bounds = array<i64: 8, 32>}, {pipeline_mode = #tpu.pipeline_mode<synchronous>, transform_indices = @transform_1, window_bounds = array<i64: 32, 128>}, {pipeline_mode = #tpu.pipeline_mode<synchronous>, transform_indices = @transform_2, window_bounds = array<i64: 128, 32>}, {transform_indices = @transform_3, window_bounds = array<i64: 8, 32>}]} {
    %c0 = arith.constant 0 : index
    %c0_0 = arith.constant 0 : index
    %0 = vector.load %arg1[%c0, %c0_0] : memref<8x32xf32, #tpu.memory_space<vmem>>, vector<8x32xf32>
    %c0_1 = arith.constant 0 : index
    %c0_2 = arith.constant 0 : index
    %1 = vector.load %arg2[%c0_1, %c0_2] : memref<32x128xf32, #tpu.memory_space<vmem>>, vector<32x128xf32>
    %cst = arith.constant dense<0.000000e+00> : vector<8x128xf32>
    %2 = tpu.matmul %0, %1, %cst {dimension_numbers = #tpu.dot_dimension_numbers<[1], [0], [0], [1], [0, 0, 1, 1], [], []>} : vector<8x32xf32>, vector<32x128xf32>, vector<8x128xf32> -> vector<8x128xf32>
    %cst_3 = arith.constant 0.000000e+00 : f32
    %3 = vector.broadcast %cst_3 : f32 to vector<8x128xf32>
    %4 = arith.maximumf %2, %3 : vector<8x128xf32>
    %c0_4 = arith.constant 0 : index
    %c0_5 = arith.constant 0 : index
    %5 = vector.load %arg3[%c0_4, %c0_5] : memref<128x32xf32, #tpu.memory_space<vmem>>, vector<128x32xf32>
    %cst_6 = arith.constant dense<0.000000e+00> : vector<8x32xf32>
    %6 = tpu.matmul %4, %5, %cst_6 {dimension_numbers = #tpu.dot_dimension_numbers<[1], [0], [0], [1], [0, 0, 1, 1], [], []>} : vector<8x128xf32>, vector<128x32xf32>, vector<8x32xf32> -> vector<8x32xf32>
    %cst_7 = arith.constant 0.000000e+00 : f32
    %7 = vector.broadcast %cst_7 : f32 to vector<8x32xf32>
    %8 = arith.maximumf %6, %7 : vector<8x32xf32>
    %c0_8 = arith.constant 0 : index
    %c0_9 = arith.constant 0 : index
    %9 = vector.load %arg4[%c0_8, %c0_9] : memref<8x32xf32, #tpu.memory_space<vmem>>, vector<8x32xf32>
    tpu.vector_store %arg4[%c0_8, %c0_9], %8 {strides = array<i32>} : memref<8x32xf32, #tpu.memory_space<vmem>>, vector<8x32xf32>,
    return
  }
  func.func @transform_0(%arg0: i32) -> (i32, i32) {
    %c0_i32 = arith.constant 0 : i32
    %c0_i32_0 = arith.constant 0 : i32
    return %arg0, %c0_i32 : i32, i32
  }
  func.func @transform_1(%arg0: i32) -> (i32, i32) {
    %c0_i32 = arith.constant 0 : i32
    %c0_i32_0 = arith.constant 0 : i32
    %c0_i32_1 = arith.constant 0 : i32
    return %c0_i32, %c0_i32_0 : i32, i32
  }
  func.func @transform_2(%arg0: i32) -> (i32, i32) {
    %c0_i32 = arith.constant 0 : i32
    %c0_i32_0 = arith.constant 0 : i32
    %c0_i32_1 = arith.constant 0 : i32
    return %c0_i32, %c0_i32_0 : i32, i32
  }
  func.func @transform_3(%arg0: i32) -> (i32, i32) {
    %c0_i32 = arith.constant 0 : i32
    %c0_i32_0 = arith.constant 0 : i32
    return %arg0, %c0_i32 : i32, i32
  }
}

</mosaic_0001>

<llo_original>
// kernel: tpu_custom_call.1
$region0: #{tpu_custom_call.1}
  #allocation0 [shape = 'u32[]', space=smem, size = 0x4, offset = 0x4, fixed_abs, tag = 'smem constant byte address 0x4 - core index']
  #allocation1 [shape = 'u32[72,128]{1,0:T(1,128)}', space=vmem, size = 0x9000, scoped, tag = 'internal scratch']
  %s0 = inlined_call_operand.vmem [shape: f32[8,32], index: 0, kind: input, shape index: {}]
  %s1 = inlined_call_operand.vmem [shape: f32[32,128], index: 1, kind: input, shape index: {}]
  %s2 = inlined_call_operand.vmem [shape: f32[128,32], index: 2, kind: input, shape index: {}]
  %s3 = inlined_call_operand.hbm [shape: f32[8,32], index: 3, kind: output, shape index: {}]
  %s4 = sld [smem:[#allocation0]]
  $region22: #{tpu_custom_call.1} parent=0
    _
  %s6 = ssub.s32 1, %s4
  %s7 = scalar_select 0, %s6, %s4
  $region1: #{tpu_custom_call.1} parent=0
    #allocation2 [shape = 'u8[4096]{0}', space=vmem, size = 0x1000, scoped, tag = 'output window, operand 0, single buffered']
    #allocation3 [shape = 's32[1]{0}', space=sflag, size = 0x4, scoped, tag = 'scoped memory for tpu_custom_call.1']
    %8 = vsyncpa [#allocation3], 0
    // Predicated region
    $region2: #{tpu_custom_call.1} parent=1 // pred_check
      _
    $region3: #{tpu_custom_call.1} parent=1 // pred_check_branch
      %10 = sbr.rel (0) target = $region5
    $region4: #{tpu_custom_call.1} parent=1 // pred_region
      _
    $region5: #{tpu_custom_call.1} parent=1 // pred_fallthru
      _
    // Predicated region
    $region6: #{tpu_custom_call.1} parent=1 // pred_check
      _
    $region7: #{tpu_custom_call.1} parent=1 // pred_check_branch
      %12 = sbr.rel (0) target = $region9
    $region8: #{tpu_custom_call.1} parent=1 // pred_region
      _
    $region9: #{tpu_custom_call.1} parent=1 // pred_fallthru
      _
    // Predicated region
    $region10: #{tpu_custom_call.1} parent=1 // pred_check
      _
    $region11: #{tpu_custom_call.1} parent=1 // pred_check_branch
      %14 = sbr.rel (0) target = $region13
    $region12: #{tpu_custom_call.1} parent=1 // pred_region
      _
    $region13: #{tpu_custom_call.1} parent=1 // pred_fallthru
      _
    %v15 = vld [vmem:[%s0] sm:$0xff]
    %v16 = vld [vmem:[%s1] sm:$0xff]
    %v17 = vld [vmem:[%s1 + $0x8] sm:$0xff]
    %v18 = vld [vmem:[%s1 + $0x10] sm:$0xff]
    %v19 = vld [vmem:[%s1 + $0x18] sm:$0xff]
    %vm20 = vcmask 261120
    %v22 = vsel %vm20, %v15, 0
    %24 = vmatpush.msra.mxu0 0.0
    %25 = vmatpush.msra.mxu0 0.0
    %26 = vmatpush.msra.mxu0 0.0
    %27 = vmatpush.msra.mxu0 0.0
    %28 = vmatpush.msra.mxu0 0.0
    %29 = vmatpush.msra.mxu0 0.0
    %30 = vmatpush.msra.mxu0 0.0
    %31 = vmatpush.msra.mxu0 0.0
    %32 = vmatpush.msra.mxu0 0.0
    %33 = vmatpush.msra.mxu0 0.0
    %34 = vmatpush.msra.mxu0 0.0
    %35 = vmatpush.msra.mxu0 0.0
    %36 = vmatpush.msra.mxu0 %v19
    %37 = vmatpush.msra.mxu0 %v18
    %38 = vmatpush.msra.mxu0 %v17
    %39 = vmatpush.msra.mxu0 %v16
    %40 = vmatmul.f32.gmra.mxu0 %v22
    %v41 = vpop.f32.mrf.mxu0
    %v42 = vadd.f32 0.0, %v41
    %43 = vdwg.mxu0
    %v44 = vmax.f32 %v42, 0.0
    %v45 = vld [vmem:[%s2] sm:$0xff]
    %v46 = vld [vmem:[%s2 + $0x8] sm:$0xff]
    %v47 = vld [vmem:[%s2 + $0x10] sm:$0xff]
    %v48 = vld [vmem:[%s2 + $0x18] sm:$0xff]
    %v49 = vld [vmem:[%s2 + $0x20] sm:$0xff]
    %v50 = vld [vmem:[%s2 + $0x28] sm:$0xff]
    %v51 = vld [vmem:[%s2 + $0x30] sm:$0xff]
    %v52 = vld [vmem:[%s2 + $0x38] sm:$0xff]
    %v53 = vld [vmem:[%s2 + $0x40] sm:$0xff]
    %v54 = vld [vmem:[%s2 + $0x48] sm:$0xff]
    %v55 = vld [vmem:[%s2 + $0x50] sm:$0xff]
    %v56 = vld [vmem:[%s2 + $0x58] sm:$0xff]
    %v57 = vld [vmem:[%s2 + $0x60] sm:$0xff]
    %v58 = vld [vmem:[%s2 + $0x68] sm:$0xff]
    %v59 = vld [vmem:[%s2 + $0x70] sm:$0xff]
    %v60 = vld [vmem:[%s2 + $0x78] sm:$0xff]
    %61 = vmatpush.msra.mxu0 %v60
    %62 = vmatpush.msra.mxu0 %v59
    %63 = vmatpush.msra.mxu0 %v58
    %64 = vmatpush.msra.mxu0 %v57
    %65 = vmatpush.msra.mxu0 %v56
    %66 = vmatpush.msra.mxu0 %v55
    %67 = vmatpush.msra.mxu0 %v54
    %68 = vmatpush.msra.mxu0 %v53
    %69 = vmatpush.msra.mxu0 %v52
    %70 = vmatpush.msra.mxu0 %v51
    %71 = vmatpush.msra.mxu0 %v50
    %72 = vmatpush.msra.mxu0 %v49
    %73 = vmatpush.msra.mxu0 %v48
    %74 = vmatpush.msra.mxu0 %v47
    %75 = vmatpush.msra.mxu0 %v46
    %76 = vmatpush.msra.mxu0 %v45
    %77 = vmatmul.f32.gmra.mxu0 %v44
    %v78 = vpop.f32.mrf.mxu0
    %v79 = vadd.f32 0.0, %v78
    %80 = vdwg.mxu0
    %v81 = vmax.f32 %v79, 0.0
    %82 = vst.msk [vmem:[#allocation2] sm:$0xff] %vm20, %v81
    // Predicated region
    $region14: #{tpu_custom_call.1} parent=1 // pred_check
      _
    $region15: #{tpu_custom_call.1} parent=1 // pred_check_branch
      %84 = sbr.rel (0) target = $region17
    $region16: #{tpu_custom_call.1} parent=1 // pred_region
      %86 = vsyncadd [#allocation3], 0
      %s88 = sshll.u32 [#allocation2], 4
      %s89 = int_to_ptr.vmem [resolvable:$true] %s88
      %s90 = sshll.u32 %s3, 4
      %s91 = int_to_ptr.hbm [resolvable:$true] %s90
      %93 = dma.vmem_to_hbm [thread:$0]  %s89, 128, %s91, [#allocation3]
    $region17: #{tpu_custom_call.1} parent=1 // pred_fallthru
      _
    // Predicated region
    $region18: #{tpu_custom_call.1} parent=1 // pred_check
      _
    $region19: #{tpu_custom_call.1} parent=1 // pred_check_branch
      %95 = sbr.rel (0) target = $region21
    $region20: #{tpu_custom_call.1} parent=1 // pred_region
      %97 = dma.done [#allocation3], 128
    $region21: #{tpu_custom_call.1} parent=1 // pred_fallthru
      _
    %98 = vsyncpa [#allocation3], 1

</llo_original>
